<compile_context>
chip_gen: v7x
topology: tpu7x:2x2x1
jax: 0.10.0
libtpu: 0.0.40
codegen_flags: <defaults>
</compile_context>

<pallas_src>
from functools import partial

import jax
import jax.numpy as jnp
from jax.experimental import pallas as pl
from jax.experimental.pallas import tpu as pltpu

LANE = 128
SUBLANE = 8
_DEFAULT_ROW_TILE = 8192          # 8192 x 128 f32 = 4 MiB streaming blocks


def _vmem_capacity_bytes():
    try:
        cap = int(pltpu.get_tpu_info().vmem_capacity_bytes)
        if cap > 0:
            return cap
    except Exception:
        pass
    return 64 << 20               # conservative (v7x-sized) fallback


# --------------------------------------------------------------------------- kernels
def _fused_kernel(x_ref, o_ref, *, n_f, inv_n, inv_nm1, level, n_levels, inv_levels):
    """Whole weight slab resident in VMEM: stats + alpha + quantize, one HBM pass."""
    if level > 0:
        x = x_ref[...].astype(jnp.float32)
        mean = jnp.sum(x) * inv_n                     # padded zeros are neutral
        var = jnp.maximum((jnp.sum(x * x) - n_f * mean * mean) * inv_nm1, 0.0)
        alpha = mean + jnp.sqrt(var) * level
        # Re-read from VMEM instead of keeping the f32 slab live across both
        # phases -> lower peak VMEM -> larger fused threshold per generation.
        y = jnp.clip(x_ref[...].astype(jnp.float32), -alpha, alpha)
    else:
        y = x_ref[...].astype(jnp.float32)
    o_ref[...] = (jnp.round(y * n_levels) * inv_levels).astype(o_ref.dtype)


def _stats_kernel(x_ref, acc_ref, accsq_ref, *, inner, tm, rows):
    """Accumulate (8,128) partial sum / sum-of-squares.

    Grid = (2, inner): leading axis is "parallel" (one partial accumulator per
    TensorCore on v7x; plain sequential elsewhere), trailing axis is the
    "arbitrary" reduction over row tiles.  Overflow steps (odd block counts)
    and rows past the true row count (ragged last block) are masked to zero.
    """
    @pl.when(pl.program_id(1) == 0)
    def _():
        acc_ref[...] = jnp.zeros_like(acc_ref)
        accsq_ref[...] = jnp.zeros_like(accsq_ref)

    step = pl.program_id(0) * inner + pl.program_id(1)
    rows_left = rows - step * tm                      # <= 0 for the overflow step
    row_id = jax.lax.broadcasted_iota(jnp.int32, (tm, 1), 0)
    x = jnp.where(row_id < rows_left, x_ref[...].astype(jnp.float32), 0.0)
    xr = x.reshape(tm // SUBLANE, SUBLANE, LANE)      # (8,128)-aligned regrouping
    acc_ref[...] += jnp.sum(xr, axis=0)               # pure VPU adds
    accsq_ref[...] += jnp.sum(xr * xr, axis=0)


def _quant_clamp_kernel(acc_ref, accsq_ref, x_ref, o_ref, *,
                        n_f, inv_n, inv_nm1, level, n_levels, inv_levels):
    """Clamp to [-alpha, alpha] then uniform-quantize.

    alpha is re-derived each step from the tiny (16,128) resident partials
    (negligible XLU work) so there is no XLA scalar epilogue between the two
    pallas_calls.  Ragged tail rows produce garbage that is written OOB and
    dropped by Pallas.
    """
    mean = jnp.sum(acc_ref[...]) * inv_n
    var = jnp.maximum((jnp.sum(accsq_ref[...]) - n_f * mean * mean) * inv_nm1, 0.0)
    alpha = mean + jnp.sqrt(var) * level
    y = jnp.clip(x_ref[...].astype(jnp.float32), -alpha, alpha)
    o_ref[...] = (jnp.round(y * n_levels) * inv_levels).astype(o_ref.dtype)


def _quant_kernel(x_ref, o_ref, *, n_levels, inv_levels):
    """level <= 0: plain uniform quantization, no clamp."""
    y = x_ref[...].astype(jnp.float32)
    o_ref[...] = (jnp.round(y * n_levels) * inv_levels).astype(o_ref.dtype)


# --------------------------------------------------------------------------- wrapper
def weight_quantize_forward(weight, w_bit, level=1.0, *,
                            fused_max_bytes=None, row_tile=None):
    """JAX/Pallas equivalent of weight_quantize_fn(w_bit).forward(weight).

    `fused_max_bytes` / `row_tile` are test/tuning overrides; leave None normally.
    """
    b = w_bit - 1
    if b == 32:
        return weight

    n_levels = float(2 ** b - 1)
    inv_levels = 1.0 / n_levels
    orig_shape = weight.shape
    orig_dtype = weight.dtype
    itemsize = jnp.dtype(orig_dtype).itemsize
    n = int(weight.size)
    level = float(level)
    n_f = float(n)
    inv_n = 1.0 / n_f
    # TODO(synk): torch.std(ddof=1) returns NaN for n == 1; we guard the divide
    # instead of reproducing the NaN in that degenerate case.
    inv_nm1 = 1.0 / float(max(n - 1, 1))
    stat_kw = dict(n_f=n_f, inv_n=inv_n, inv_nm1=inv_nm1, level=level,
                   n_levels=n_levels, inv_levels=inv_levels)

    vmem_cap = _vmem_capacity_bytes()
    vmem_budget = (vmem_cap // 4) * 3                 # leave headroom vs physical

    rows = -(-n // LANE)
    padded = rows * LANE != n
    if padded:
        # numel not a multiple of 128: one pad + one slice copy is unavoidable
        # for a lane-dense 2D view (only hits small / odd-shaped weights).
        flat = jnp.pad(weight.reshape(-1), (0, rows * LANE - n))
        x2d = flat.reshape(rows, LANE)
    else:
        x2d = weight.reshape(rows, LANE)              # free bitcast, no copy

    # Fused path budget: in + out + ~3 f32 temps.
    fused_bytes = n * (2 * itemsize + 12)
    fmax = vmem_budget if fused_max_bytes is None else int(fused_max_bytes)

    if fused_bytes <= fmax or rows < 2 * SUBLANE:
        # --- single fused call: slab resident in VMEM, 1 read + 1 write ---
        out2d = pl.pallas_call(
            partial(_fused_kernel, **stat_kw),
            out_shape=jax.ShapeDtypeStruct((rows, LANE), orig_dtype),
            compiler_params=pltpu.CompilerParams(vmem_limit_bytes=vmem_budget),
        )(x2d)
    else:
        stream_limit = min(vmem_budget, 64 << 20)
        tm = _DEFAULT_ROW_TILE if row_tile is None else int(row_tile)
        tm = max(SUBLANE, (min(tm, rows) // SUBLANE) * SUBLANE)
        grid_rows = pl.cdiv(rows, tm)

        quant_kernel = partial(_quant_kernel, n_levels=n_levels,
                               inv_levels=inv_levels)
        quant_in_specs = [pl.BlockSpec((tm, LANE), lambda i: (i, 0))]
        quant_args = [x2d]

        if level > 0:
            # --- pass 1: partial sums, unconditional 2-way TensorCore split ---
            inner = pl.cdiv(grid_rows, 2)

            def x_map(c, j):
                # Clamp the overflow step of an odd block count back in range;
                # its contribution is masked to zero inside the kernel.
                return (jnp.minimum(c * inner + j, grid_rows - 1), 0)

            acc, accsq = pl.pallas_call(
                partial(_stats_kernel, inner=inner, tm=tm, rows=rows),
                out_shape=(jax.ShapeDtypeStruct((2 * SUBLANE, LANE), jnp.float32),
                           jax.ShapeDtypeStruct((2 * SUBLANE, LANE), jnp.float32)),
                grid=(2, inner),
                in_specs=[pl.BlockSpec((tm, LANE), x_map)],
                out_specs=(pl.BlockSpec((SUBLANE, LANE), lambda c, j: (c, 0)),
                           pl.BlockSpec((SUBLANE, LANE), lambda c, j: (c, 0))),
                compiler_params=pltpu.CompilerParams(
                    dimension_semantics=("parallel", "arbitrary"),
                    vmem_limit_bytes=stream_limit),
            )(x2d)

            quant_kernel = partial(_quant_clamp_kernel, **stat_kw)
            quant_in_specs = [
                pl.BlockSpec((2 * SUBLANE, LANE), lambda i: (0, 0)),
                pl.BlockSpec((2 * SUBLANE, LANE), lambda i: (0, 0)),
            ] + quant_in_specs
            quant_args = [acc, accsq] + quant_args

        # --- pass 2: elementwise quantization (ragged OOB writes are dropped) ---
        out2d = pl.pallas_call(
            quant_kernel,
            out_shape=jax.ShapeDtypeStruct((rows, LANE), orig_dtype),
            grid=(grid_rows,),
            in_specs=quant_in_specs,
            out_specs=pl.BlockSpec((tm, LANE), lambda i: (i, 0)),
            compiler_params=pltpu.CompilerParams(
                dimension_semantics=("parallel",),
                vmem_limit_bytes=stream_limit),
        )(*quant_args)

    out = out2d.reshape(-1)
    if padded:
        out = out[:n]
    return out.reshape(orig_shape)


# --------------------------------------------------------------------------- reference
def _reference(weight, w_bit, level=1.0):
    """Pure-JAX reference mirroring the PyTorch forward exactly."""
    b = w_bit - 1
    if b == 32:
        return weight
    if level > 0:
        mean = jnp.mean(weight)
        std = jnp.std(weight, ddof=1)
        alpha = mean + std * level
        w_c = jnp.clip(weight, -alpha, alpha)
    else:
        w_c = weight
    n_lv = 2 ** b - 1
    return (jnp.round(jnp.abs(w_c) * n_lv) / n_lv * jnp.sign(w_c)).astype(weight.dtype)


# TODO(synk): the straight-through-estimator backward of the autograd.Function is
# not implemented (forward only, matching the module's inference behavior).
if __name__ == "__main__":
    key = jax.random.PRNGKey(0)
    W_BIT = 4     # module w_bit=4 -> b = 3 bits, 7 magnitude levels
    LEVEL = 1.0   # the module references a global `level`; fixed to 1 here

    # Module parameter from __init__ (registered but unused in forward):
    wgt_alpha = jnp.float32(1.0)

    k1, k2, k3 = jax.random.split(key, 3)

    # small conv weight (OIHW), numel % 128 != 0  -> pad path, fused kernel
    w_conv = jax.random.normal(k1, (8, 4, 3, 3), jnp.float32) * 0.5
    # 1M-param linear weight -> fused single-call path on every generation
    w_lin = jax.random.normal(k2, (1024, 1024), jnp.float32) * 0.3
    # ragged shape: rows = 5000 (not 8-aligned), no pad needed (numel % 128 == 0)
    w_odd = jax.random.normal(k3, (1000, 640), jnp.float32) * 0.3

    tests = [
        ("conv_small_fused", w_conv, dict()),
        ("linear_1024_fused", w_lin, dict()),
        # forced streaming: even block count, 2-way stats split, folded alpha
        ("linear_1024_stream", w_lin, dict(fused_max_bytes=0, row_tile=512)),
        # forced streaming: odd block count (clamped overflow step) + ragged tail
        ("ragged_stream", w_odd, dict(fused_max_bytes=0, row_tile=1024)),
    ]

    for name, w, kw in tests:
        w_q = jax.block_until_ready(weight_quantize_forward(w, W_BIT, LEVEL, **kw))
        ref = _reference(w, W_BIT, LEVEL)
        assert w_q.shape == w.shape and w_q.dtype == w.dtype, name
        assert jnp.allclose(w_q, ref, atol=1e-6), f"mismatch vs reference: {name}"

    # level <= 0 branch (no clamping), fused and streaming
    w_q0 = jax.block_until_ready(weight_quantize_forward(w_conv, W_BIT, level=0.0))
    assert jnp.allclose(w_q0, _reference(w_conv, W_BIT, 0.0), atol=1e-6)
    w_q0s = jax.block_until_ready(weight_quantize_forward(
        w_lin, W_BIT, level=0.0, fused_max_bytes=0, row_tile=512))
    assert jnp.allclose(w_q0s, _reference(w_lin, W_BIT, 0.0), atol=1e-6)

    # w_bit == 33 -> b == 32 -> identity pass-through
    w_id = weight_quantize_forward(w_conv, 33, LEVEL)
    assert jnp.allclose(w_id, w_conv)

    print("KERNEL_OK")
</pallas_src>

<mosaic_0001>
module attributes {stable_mosaic.version = 11 : i64} {
  func.func @_fused_kernel(%arg0: memref<3x128xf32, #tpu.memory_space<vmem>>, %arg1: memref<3x128xf32, #tpu.memory_space<vmem>>) attributes {dimension_semantics = [], scalar_prefetch = 0 : i64, scratch_operands = 0 : i64, tpu.core_type = #tpu.core_type<tc>} {
    %c0 = arith.constant 0 : index
    %c0_0 = arith.constant 0 : index
    %0 = vector.load %arg0[%c0, %c0_0] : memref<3x128xf32, #tpu.memory_space<vmem>>, vector<3x128xf32>
    %1 = vector.shape_cast %0 : vector<3x128xf32> to vector<1x3x128xf32>
    %cst = arith.constant dense<0.000000e+00> : vector<1xf32>
    %2 = vector.multi_reduction <add>, %1, %cst [1, 2] : vector<1x3x128xf32> to vector<1xf32>
    %3 = vector.shape_cast %2 : vector<1xf32> to vector<1x1x1xf32>
    %4 = vector.extract %3[0, 0, 0] : f32 from vector<1x1x1xf32>
    %cst_1 = arith.constant 0.00347222225 : f32
    %5 = arith.mulf %4, %cst_1 : f32
    %6 = arith.mulf %0, %0 : vector<3x128xf32>
    %7 = vector.shape_cast %6 : vector<3x128xf32> to vector<1x3x128xf32>
    %cst_2 = arith.constant dense<0.000000e+00> : vector<1xf32>
    %8 = vector.multi_reduction <add>, %7, %cst_2 [1, 2] : vector<1x3x128xf32> to vector<1xf32>
    %9 = vector.shape_cast %8 : vector<1xf32> to vector<1x1x1xf32>
    %10 = vector.extract %9[0, 0, 0] : f32 from vector<1x1x1xf32>
    %cst_3 = arith.constant 2.880000e+02 : f32
    %11 = arith.mulf %cst_3, %5 : f32
    %12 = arith.mulf %11, %5 : f32
    %13 = arith.subf %10, %12 : f32
    %cst_4 = arith.constant 0.00348432059 : f32
    %14 = arith.mulf %13, %cst_4 : f32
    %cst_5 = arith.constant 0.000000e+00 : f32
    %15 = arith.maximumf %14, %cst_5 : f32
    %16 = math.sqrt %15 : f32
    %cst_6 = arith.constant 1.000000e+00 : f32
    %17 = arith.mulf %16, %cst_6 : f32
    %18 = arith.addf %5, %17 : f32
    %c0_7 = arith.constant 0 : index
    %c0_8 = arith.constant 0 : index
    %19 = vector.load %arg0[%c0_7, %c0_8] : memref<3x128xf32, #tpu.memory_space<vmem>>, vector<3x128xf32>
    %cst_9 = arith.constant 0.000000e+00 : f32
    %20 = arith.subf %cst_9, %18 : f32
    %21 = vector.broadcast %20 : f32 to vector<3x128xf32>
    %22 = arith.maximumf %21, %19 : vector<3x128xf32>
    %23 = vector.broadcast %18 : f32 to vector<3x128xf32>
    %24 = arith.minimumf %23, %22 : vector<3x128xf32>
    %cst_10 = arith.constant 7.000000e+00 : f32
    %25 = vector.broadcast %cst_10 : f32 to vector<3x128xf32>
    %26 = arith.mulf %24, %25 : vector<3x128xf32>
    %27 = math.roundeven %26 : vector<3x128xf32>
    %cst_11 = arith.constant 0.142857149 : f32
    %28 = vector.broadcast %cst_11 : f32 to vector<3x128xf32>
    %29 = arith.mulf %27, %28 : vector<3x128xf32>
    %c0_12 = arith.constant 0 : index
    %c0_13 = arith.constant 0 : index
    %30 = vector.load %arg1[%c0_12, %c0_13] : memref<3x128xf32, #tpu.memory_space<vmem>>, vector<3x128xf32>
    tpu.vector_store %arg1[%c0_12, %c0_13], %29 {strides = array<i32>} : memref<3x128xf32, #tpu.memory_space<vmem>>, vector<3x128xf32>,
    return
  }
}

</mosaic_0001>

<llo_original>
// kernel: tpu_custom_call.1
$region0: #{tpu_custom_call.1}
  #allocation0 [shape = 'u32[]', space=smem, size = 0x4, offset = 0x4, fixed_abs, tag = 'smem constant byte address 0x4 - core index']
  #allocation1 [shape = 'u32[144,128]{1,0:T(1,128)}', space=vmem, size = 0x12000, scoped, tag = 'internal scratch']
  %s0 = inlined_call_operand.hbm [shape: f32[3,128], index: 0, kind: input, shape index: {}]
  %s1 = inlined_call_operand.hbm [shape: f32[3,128], index: 1, kind: output, shape index: {}]
  %s2 = sld [smem:[#allocation0]]
  $region18: #{tpu_custom_call.1} parent=0
    _
  %s4 = ssub.s32 1, %s2
  %s5 = scalar_select 0, %s4, %s2
  $region1: #{tpu_custom_call.1} parent=0
    #allocation2 [shape = 'u8[2048]{0}', space=vmem, size = 0x800, scoped, tag = 'input window, operand 0, single buffered']
    #allocation3 [shape = 's32[1]{0}', space=sflag, size = 0x4, scoped, tag = 'scoped memory for tpu_custom_call.1']
    #allocation4 [shape = 's32[1]{0}', space=sflag, size = 0x4, scoped, tag = 'scoped memory for tpu_custom_call.1']
    #allocation5 [shape = 'u8[2048]{0}', space=vmem, size = 0x800, scoped, tag = 'output window, operand 0, single buffered']
    %6 = vsyncpa [#allocation3], 0
    %7 = vsyncpa [#allocation4], 0
    // Predicated region
    $region2: #{tpu_custom_call.1} parent=1 // pred_check
      _
    $region3: #{tpu_custom_call.1} parent=1 // pred_check_branch
      %9 = sbr.rel (0) target = $region5
    $region4: #{tpu_custom_call.1} parent=1 // pred_region
      %s11 = ssub.s32 64, 64
      %12 = vsyncadd [#allocation3], %s11
      %s14 = sshll.u32 [#allocation2], 4
      %s15 = int_to_ptr.vmem [resolvable:$true] %s14
      %17 = dma.hbm_to_vmem [thread:$0]  %s0, 64, %s15, [#allocation3]
    $region5: #{tpu_custom_call.1} parent=1 // pred_fallthru
      _
    // Predicated region
    $region6: #{tpu_custom_call.1} parent=1 // pred_check
      _
    $region7: #{tpu_custom_call.1} parent=1 // pred_check_branch
      %19 = sbr.rel (0) target = $region9
    $region8: #{tpu_custom_call.1} parent=1 // pred_region
      %20 = dma.done [#allocation3], 64
    $region9: #{tpu_custom_call.1} parent=1 // pred_fallthru
      _
    %v21 = vld [vmem:[#allocation2] sm:$0x7]
    %vm22 = vcmask 1042432
    %v23 = vsel %vm22, %v21, 0.0
    %24 = vadd.xlane.f32.xlu0 %v23
    %v25 = vpop.xlane.xlu0 %24
    %v26 = vrot.slane %v25, 4
    %v27 = vadd.f32 %v25, %v26
    %v28 = vrot.slane %v27, 2
    %v29 = vadd.f32 %v27, %v28
    %v30 = vrot.slane %v29, 1
    %v31 = vadd.f32 %v29, %v30
    %s32 = vtos %v31
    %s33 = smul.f32 %s32, 0.0034722222
    %v34 = vmul.f32 %v21, %v21
    %v35 = vsel %vm22, %v34, 0.0
    %36 = vadd.xlane.f32.xlu0 %v35
    %v37 = vpop.xlane.xlu0 %36
    %v38 = vrot.slane %v37, 4
    %v39 = vadd.f32 %v37, %v38
    %v40 = vrot.slane %v39, 2
    %v41 = vadd.f32 %v39, %v40
    %v42 = vrot.slane %v41, 1
    %v43 = vadd.f32 %v41, %v42
    %s44 = vtos %v43
    %s45 = smul.f32 %s33, 288.0
    %s46 = smul.f32 %s45, %s33
    %s47 = ssub.f32 %s44, %s46
    %s48 = smul.f32 %s47, 0.0034843206
    %s49 = smax.f32 %s48, 0.0
    %v50 = vstv %s49
    %v51 = vrsqrt.pop %v50
    %v52 = vmul.f32 %v50, %v51
    %vm53 = vcmp.eq.f32.partialorder %v50, inf
    %v54 = vsel %vm53, %v50, %v52
    %vm55 = vcmp.eq.f32.partialorder %v50, 0.0
    %v56 = vand.u32 %v50, 2147483648
    %v57 = vsel %vm55, %v56, %v54
    %s58 = vtos %v57
    %s59 = sadd.f32 %s33, %s58
    %s60 = ssub.f32 0.0, %s59
    %v61 = vstv %s60
    %v62 = vmax.f32 %v61, %v21
    %v63 = vstv %s59
    %v64 = vmin.f32 %v63, %v62
    %v65 = vmul.f32 %v64, 7.0
    %v66 = vround.ne.pseudo %v65
    %v67 = vmul.f32 %v66, 0.14285715
    %68 = vst [vmem:[#allocation5] sm:$0x7] %v67
    // Predicated region
    $region10: #{tpu_custom_call.1} parent=1 // pred_check
      _
    $region11: #{tpu_custom_call.1} parent=1 // pred_check_branch
      %70 = sbr.rel (0) target = $region13
    $region12: #{tpu_custom_call.1} parent=1 // pred_region
      %s72 = ssub.s32 64, 64
      %73 = vsyncadd [#allocation4], %s72
      %s75 = sshll.u32 [#allocation5], 4
      %s76 = int_to_ptr.vmem [resolvable:$true] %s75
      %78 = dma.vmem_to_hbm [thread:$0]  %s76, 64, %s1, [#allocation4]
    $region13: #{tpu_custom_call.1} parent=1 // pred_fallthru
      _
    // Predicated region
    $region14: #{tpu_custom_call.1} parent=1 // pred_check
      _
    $region15: #{tpu_custom_call.1} parent=1 // pred_check_branch
      %80 = sbr.rel (0) target = $region17
    $region16: #{tpu_custom_call.1} parent=1 // pred_region
      %81 = dma.done [#allocation4], 64
    $region17: #{tpu_custom_call.1} parent=1 // pred_fallthru
      _
    %82 = vsyncpa [#allocation3], 1
    %83 = vsyncpa [#allocation4], 1

</llo_original>
